<compile_context>
chip_gen: v5e
topology: v5e:2x2
jax: 0.10.0
libtpu: 0.0.40
codegen_flags: <defaults>
</compile_context>

<pallas_src>
import jax
import jax.numpy as jnp
from jax.experimental import pallas as pl
from jax.experimental.pallas import tpu as pltpu

SAMPLE_RATE = 44100.0

_SUBLANE = 8
_LANE = 128
_BLOCK_BYTES = 4 << 20        # per-buffer block budget (4 MiB)
_VMEM_LIMIT_BYTES = 48 << 20  # explicit scoped-VMEM limit (headroom on all gens)
_SMALL_BYTES = 1 << 18        # below 256 KiB: skip Pallas, let XLA fuse -x


# ----------------------------------------------------------------------------
# Pallas kernel: elementwise polarity inversion on one (rows, c_blk) tile
# ----------------------------------------------------------------------------
def _negate_kernel(x_ref, o_ref):
    o_ref[...] = -x_ref[...]


def _choose_cols_block(rows, cols, itemsize):
    """Lane-aligned column tile: bounded VMEM per block, >=2 grid steps when possible."""
    pad_rows = max(rows, _SUBLANE)                      # sublane padding for small rows
    budget_cols = _BLOCK_BYTES // (pad_rows * itemsize)
    blk = max(_LANE, (budget_cols // _LANE) * _LANE)
    if cols > _LANE:
        # Cap at ~half the width (128-aligned) so the grid has >= 2 independent
        # steps — lets v7x shard the parallel axis across both TensorCores.
        half_aligned = -(-(-(-cols // 2)) // _LANE) * _LANE
        blk = min(blk, max(_LANE, half_aligned))
    if blk >= cols:
        return cols        # full extent: always a legal block shape
    return blk             # multiple of 128: legal; cdiv grid masks the tail


def phase_inversion_process(x, train=False, in_place=False):
    """x: (bs, 1, T) -> (bs, 1, T), y = -x, via a tiled Pallas kernel.

    Set in_place=True only when the caller donates x (otherwise XLA inserts a
    defensive copy of x, adding HBM traffic).
    """
    bs, chs, T = x.shape
    assert chs == 1
    dtype = x.dtype
    itemsize = jnp.dtype(dtype).itemsize
    n = bs * chs * T

    # Tiny-input fast path: dispatch overhead would dominate; XLA fuses this.
    if n * itemsize < _SMALL_BYTES:
        return -x

    # Copy-free 2D view with time/samples on the lane (fast) axis.
    if n % _SUBLANE == 0:
        rows, cols = _SUBLANE, n // _SUBLANE           # full-sublane layout
    else:
        rows, cols = bs * chs, T                       # fallback: still lane-dense
    x2d = jnp.reshape(x, (rows, cols))                 # contiguous reshape: free

    c_blk = _choose_cols_block(rows, cols, itemsize)
    grid = (pl.cdiv(cols, c_blk),)

    extra = {}
    if in_place:
        extra["input_output_aliases"] = {0: 0}

    y2d = pl.pallas_call(
        _negate_kernel,
        out_shape=jax.ShapeDtypeStruct((rows, cols), dtype),
        grid=grid,
        in_specs=[pl.BlockSpec((rows, c_blk), lambda t: (0, t))],
        out_specs=pl.BlockSpec((rows, c_blk), lambda t: (0, t)),
        compiler_params=pltpu.CompilerParams(
            dimension_semantics=("parallel",),
            vmem_limit_bytes=_VMEM_LIMIT_BYTES),
        cost_estimate=pl.CostEstimate(
            flops=n,
            transcendentals=0,
            bytes_accessed=2 * n * itemsize),
        **extra,
    )(x2d)

    return jnp.reshape(y2d, (bs, chs, T))              # contiguous reshape: free


# ----------------------------------------------------------------------------
# PhaseInversion forward (matches the PyTorch module)
# ----------------------------------------------------------------------------
def get_param_dict(params):
    return {}


def phase_inversion_forward(x, control_params=None, train=False,
                            sample_rate=SAMPLE_RATE):
    bs, chs, seq_len = x.shape
    assert chs == 1
    assert control_params is None
    return phase_inversion_process(x, train=train), get_param_dict(control_params)


if __name__ == "__main__":
    key = jax.random.PRNGKey(0)
    k1, k2, k3 = jax.random.split(key, 3)

    # Case 1: tiny input (16 KiB) -> XLA fast path; exact result, empty params.
    x_small = jax.random.normal(k1, (2, 1, 2048), dtype=jnp.float32)
    y_small, param_dict = phase_inversion_forward(x_small, None)
    y_small = jax.block_until_ready(y_small)
    assert param_dict == {}
    assert y_small.shape == x_small.shape
    assert jnp.array_equal(y_small, -x_small)

    # Case 2: main Pallas path — full-sublane (8, N/8) view, >=2 grid steps.
    x_big = jax.random.normal(k2, (2, 1, 131072), dtype=jnp.float32)
    y_big, _ = phase_inversion_forward(x_big, None)
    y_big = jax.block_until_ready(y_big)
    assert y_big.shape == x_big.shape and y_big.dtype == x_big.dtype
    assert jnp.array_equal(y_big, -x_big)

    # Case 3: N not divisible by 8 -> (bs, T) fallback layout, still via Pallas.
    x_odd = jax.random.normal(k3, (1, 1, 70001), dtype=jnp.float32)
    y_odd, _ = phase_inversion_forward(x_odd, None)
    y_odd = jax.block_until_ready(y_odd)
    assert jnp.array_equal(y_odd, -x_odd)

    print("KERNEL_OK")
</pallas_src>

<mosaic_0001>
module attributes {stable_mosaic.version = 11 : i64} {
  func.func @_negate_kernel(%arg0: i32, %arg1: memref<8x16384xf32, #tpu.memory_space<vmem>>, %arg2: memref<8x16384xf32, #tpu.memory_space<vmem>>) attributes {dimension_semantics = [#tpu.dimension_semantics<parallel>], iteration_bounds = array<i64: 2>, scalar_prefetch = 0 : i64, scratch_operands = 0 : i64, tpu.core_type = #tpu.core_type<tc>, window_params = [{transform_indices = @transform_0, window_bounds = array<i64: 8, 16384>}, {transform_indices = @transform_1, window_bounds = array<i64: 8, 16384>}]} {
    %c0 = arith.constant 0 : index
    %c0_0 = arith.constant 0 : index
    %0 = vector.load %arg1[%c0, %c0_0] : memref<8x16384xf32, #tpu.memory_space<vmem>>, vector<8x16384xf32>
    %cst = arith.constant 0.000000e+00 : f32
    %1 = vector.broadcast %cst : f32 to vector<8x16384xf32>
    %2 = arith.subf %1, %0 : vector<8x16384xf32>
    %c0_1 = arith.constant 0 : index
    %c0_2 = arith.constant 0 : index
    %3 = vector.load %arg2[%c0_1, %c0_2] : memref<8x16384xf32, #tpu.memory_space<vmem>>, vector<8x16384xf32>
    tpu.vector_store %arg2[%c0_1, %c0_2], %2 {strides = array<i32>} : memref<8x16384xf32, #tpu.memory_space<vmem>>, vector<8x16384xf32>,
    return
  }
  func.func @transform_0(%arg0: i32) -> (i32, i32) {
    %c0_i32 = arith.constant 0 : i32
    %c0_i32_0 = arith.constant 0 : i32
    return %c0_i32, %arg0 : i32, i32
  }
  func.func @transform_1(%arg0: i32) -> (i32, i32) {
    %c0_i32 = arith.constant 0 : i32
    %c0_i32_0 = arith.constant 0 : i32
    return %c0_i32, %arg0 : i32, i32
  }
}

</mosaic_0001>

<llo_original>
// kernel: tpu_custom_call.1
$region0: #{tpu_custom_call.1}
  #allocation0 [shape = 'u32[]', space=smem, size = 0x4, offset = 0x4, fixed_abs, tag = 'smem constant byte address 0x4 - core index']
  #allocation1 [shape = 'u32[72,128]{1,0:T(1,128)}', space=vmem, size = 0x9000, scoped, tag = 'internal scratch']
  %s0 = inlined_call_operand.hbm [shape: f32[8,32768], index: 0, kind: input, shape index: {}]
  %s1 = inlined_call_operand.hbm [shape: f32[8,32768], index: 1, kind: output, shape index: {}]
  %s2 = sld [smem:[#allocation0]]
  $region41: #{tpu_custom_call.1} parent=0
    _
  %s4 = ssub.s32 1, %s2
  %s5 = scalar_select 0, %s4, %s2
  $region1: #{tpu_custom_call.1} parent=0
    #allocation2 [shape = 'u8[1048576]{0}', space=vmem, size = 0x100000, scoped, tag = 'input window, operand 0']
    #allocation3 [shape = 's32[2]{0}', space=sflag, size = 0x8, scoped, tag = 'scoped memory for tpu_custom_call.1']
    #allocation4 [shape = 's32[2]{0}', space=sflag, size = 0x8, scoped, tag = 'scoped memory for tpu_custom_call.1']
    #allocation5 [shape = 'u8[1048576]{0}', space=vmem, size = 0x100000, scoped, tag = 'output window, operand 0']
    %6 = vsyncpa [#allocation3], 0
    %s7 = scalar_lea.sflag [#allocation3], 1
    %8 = vsyncpa %s7, 0
    %9 = vsyncpa [#allocation4], 0
    %s10 = scalar_lea.sflag [#allocation4], 1
    %11 = vsyncpa %s10, 0
    loop: start=0, step=1, limit=4
    $region2: #{tpu_custom_call.1} parent=1 // loop_pre_header
      _
    $region3: #{tpu_custom_call.1} parent=1 // loop_header
      %s13 = sphi 0, %s17
      %p14 = scmp.ge.s32.totalorder %s13, 4
      %s23 = sphi 0, %s25
      %s26 = sphi 0, %s23
      %s27 = sphi 0, %s26
      %s43 = sphi 0, %s27
      %s49 = sphi 0, %s51
      %s52 = sphi 0, %s49
      %s53 = sphi 0, %s52
      %s69 = sphi 0, %s53
    $region4: #{tpu_custom_call.1} parent=1 // loop_header_branch
      %16 = sbr.rel (%p14) target = $region8
    $region5: #{tpu_custom_call.1} parent=1 // loop_body
      %s18 = ssub.s32 %s13, 1
      %s19 = ssub.s32 %s13, 2
      %s20 = sadd.s32 %s13, 1
      %s21 = ssub.s32 %s13, %s20
      %p22 = scmp.eq.s32.totalorder %s21, 0
      %s24 = sadd.s32 %s23, 1
      %s25 = scalar_select %p22, %s23, %s24
      %p28 = pneg %p22
      %p29 = scmp.eq.s32.totalorder %s13, 1
      %p30 = por %p28, %p29
      %p31 = scmp.ne.s32.totalorder %s23, %s26
      %p32 = scmp.eq.s32.totalorder %s13, 0
      %p33 = por %p31, %p32
      %p34 = scmp.ne.s32.totalorder %s23, %s26
      %p35 = scmp.eq.s32.totalorder %s18, 1
      %p36 = por %p34, %p35
      %p37 = scmp.ne.s32.totalorder %s26, %s27
      %p38 = scmp.eq.s32.totalorder %s18, 0
      %p39 = por %p37, %p38
      %p40 = scmp.ne.s32.totalorder %s26, %s27
      %p41 = scmp.eq.s32.totalorder %s19, 1
      %p42 = por %p40, %p41
      %p44 = scmp.ne.s32.totalorder %s27, %s43
      %p45 = scmp.eq.s32.totalorder %s19, 0
      %p46 = por %p44, %p45
      %s47 = ssub.s32 %s13, %s20
      %p48 = scmp.eq.s32.totalorder %s47, 0
      %s50 = sadd.s32 %s49, 1
      %s51 = scalar_select %p48, %s49, %s50
      %p54 = pneg %p48
      %p55 = scmp.eq.s32.totalorder %s13, 1
      %p56 = por %p54, %p55
      %p57 = scmp.ne.s32.totalorder %s49, %s52
      %p58 = scmp.eq.s32.totalorder %s13, 0
      %p59 = por %p57, %p58
      %p60 = scmp.ne.s32.totalorder %s49, %s52
      %p61 = scmp.eq.s32.totalorder %s18, 1
      %p62 = por %p60, %p61
      %p63 = scmp.ne.s32.totalorder %s52, %s53
      %p64 = scmp.eq.s32.totalorder %s18, 0
      %p65 = por %p63, %p64
      %p66 = scmp.ne.s32.totalorder %s52, %s53
      %p67 = scmp.eq.s32.totalorder %s19, 1
      %p68 = por %p66, %p67
      %p70 = scmp.ne.s32.totalorder %s53, %s69
      %p71 = scmp.eq.s32.totalorder %s19, 0
      %p72 = por %p70, %p71
      %p73 = scmp.le.s32.totalorder 1, %s13
      %p74 = scmp.lt.s32.totalorder %s13, 3
      %p75 = pnand %p73, %p74
      %p76 = pneg %p75
      // Predicated region
      $region9: #{tpu_custom_call.1} parent=5 // pred_check
        _
      $region10: #{tpu_custom_call.1} parent=5 // pred_check_branch
        %78 = sbr.rel (%p75) target = $region12
      $region11: #{tpu_custom_call.1} parent=5 // pred_region
        %s79 = ssub.s32 %s13, 1
      $region12: #{tpu_custom_call.1} parent=5 // pred_fallthru
        _
      %p80 = scmp.lt.s32.totalorder %s13, 2
      // Predicated region
      $region13: #{tpu_custom_call.1} parent=5 // pred_check
        %p81 = pneg %p80
      $region14: #{tpu_custom_call.1} parent=5 // pred_check_branch
        %83 = sbr.rel (%p81) target = $region16
      $region15: #{tpu_custom_call.1} parent=5 // pred_region
        // Predicated region
        $region17: #{tpu_custom_call.1} parent=15 // pred_check
          %p84 = pneg %p33
        $region18: #{tpu_custom_call.1} parent=15 // pred_check_branch
          %86 = sbr.rel (%p84) target = $region20
        $region19: #{tpu_custom_call.1} parent=15 // pred_region
          %s87 = sand.u32 %s23, 1
          %s88 = scalar_lea.sflag [#allocation3], %s87
          %s89 = sand.u32 %s23, 1
          %s90 = smul.addr %s89, 1024
          %s91 = scalar_lea.vmem [#allocation2], %s90
          %s92 = smul.u32 128, %s13
          %94 = vsyncadd %s88, 0
          %s95 = smul.addr %s92, 8
          %s96 = scalar_lea.hbm %s0, %s95
          %s98 = sshll.u32 %s96, 4
          %s99 = int_to_ptr.hbm [resolvable:$true] %s98
          %s100 = sshll.u32 %s91, 4
          %s101 = int_to_ptr.vmem [resolvable:$true] %s100
          %103 = dma.hbm_to_vmem [thread:$0]  %s99, 16384, %s101, %s88
        $region20: #{tpu_custom_call.1} parent=15 // pred_fallthru
          _
      $region16: #{tpu_custom_call.1} parent=5 // pred_fallthru
        _
      %p104 = scmp.le.s32.totalorder 1, %s13
      %p105 = scmp.lt.s32.totalorder %s13, 3
      %p106 = pnand %p104, %p105
      %p107 = pneg %p106
      // Predicated region
      $region21: #{tpu_custom_call.1} parent=5 // pred_check
        _
      $region22: #{tpu_custom_call.1} parent=5 // pred_check_branch
        %109 = sbr.rel (%p106) target = $region24
      $region23: #{tpu_custom_call.1} parent=5 // pred_region
        %s110 = ssub.s32 %s13, 1
        %s111 = sand.u32 %s26, 1
        %s112 = scalar_lea.sflag [#allocation3], %s111
        %s113 = sand.u32 %s26, 1
        %s114 = smul.addr %s113, 1024
        %s115 = scalar_lea.vmem [#allocation2], %s114
        // Predicated region
        $region25: #{tpu_custom_call.1} parent=23 // pred_check
          %p116 = pneg %p39
        $region26: #{tpu_custom_call.1} parent=23 // pred_check_branch
          %118 = sbr.rel (%p116) target = $region28
        $region27: #{tpu_custom_call.1} parent=23 // pred_region
          %120 = dma.done %s112, 16384
        $region28: #{tpu_custom_call.1} parent=23 // pred_fallthru
          _
        %s121 = sand.u32 %s26, 1
        %s122 = scalar_lea.sflag [#allocation3], %s121
        %s123 = sand.u32 %s26, 1
        %s124 = smul.addr %s123, 1024
        %s125 = scalar_lea.vmem [#allocation2], %s124
        %p126 = pneg %p39
        %p127 = pneg %p36
        %p128 = pneg %p65
        %p129 = pneg %p62
        %s130 = sand.u32 %s52, 1
        %s131 = scalar_lea.sflag [#allocation4], %s130
        %s132 = sand.u32 %s52, 1
        %s133 = smul.addr %s132, 1024
        %s134 = scalar_lea.vmem [#allocation5], %s133
        %s135 = smul.u32 128, %s18
        %s136 = smul.u32 128, %s18
        %v137 = vld [vmem:[%s115] sm:$0xff]
        %v138 = vld [vmem:[%s115 + $0x8] sm:$0xff]
        %v139 = vld [vmem:[%s115 + $0x10] sm:$0xff]
        %v140 = vld [vmem:[%s115 + $0x18] sm:$0xff]
        %v141 = vld [vmem:[%s115 + $0x20] sm:$0xff]
        %v142 = vld [vmem:[%s115 + $0x28] sm:$0xff]
        %v143 = vld [vmem:[%s115 + $0x30] sm:$0xff]
        %v144 = vld [vmem:[%s115 + $0x38] sm:$0xff]
        %v145 = vld [vmem:[%s115 + $0x40] sm:$0xff]
        %v146 = vld [vmem:[%s115 + $0x48] sm:$0xff]
        %v147 = vld [vmem:[%s115 + $0x50] sm:$0xff]
        %v148 = vld [vmem:[%s115 + $0x58] sm:$0xff]
        %v149 = vld [vmem:[%s115 + $0x60] sm:$0xff]
        %v150 = vld [vmem:[%s115 + $0x68] sm:$0xff]
        %v151 = vld [vmem:[%s115 + $0x70] sm:$0xff]
        %v152 = vld [vmem:[%s115 + $0x78] sm:$0xff]
        %v153 = vld [vmem:[%s115 + $0x80] sm:$0xff]
        %v154 = vld [vmem:[%s115 + $0x88] sm:$0xff]
        %v155 = vld [vmem:[%s115 + $0x90] sm:$0xff]
        %v156 = vld [vmem:[%s115 + $0x98] sm:$0xff]
        %v157 = vld [vmem:[%s115 + $0xa0] sm:$0xff]
        %v158 = vld [vmem:[%s115 + $0xa8] sm:$0xff]
        %v159 = vld [vmem:[%s115 + $0xb0] sm:$0xff]
        %v160 = vld [vmem:[%s115 + $0xb8] sm:$0xff]
        %v161 = vld [vmem:[%s115 + $0xc0] sm:$0xff]
        %v162 = vld [vmem:[%s115 + $0xc8] sm:$0xff]
        %v163 = vld [vmem:[%s115 + $0xd0] sm:$0xff]
        %v164 = vld [vmem:[%s115 + $0xd8] sm:$0xff]
        %v165 = vld [vmem:[%s115 + $0xe0] sm:$0xff]
        %v166 = vld [vmem:[%s115 + $0xe8] sm:$0xff]
        %v167 = vld [vmem:[%s115 + $0xf0] sm:$0xff]
        %v168 = vld [vmem:[%s115 + $0xf8] sm:$0xff]
        %v169 = vld [vmem:[%s115 + $0x100] sm:$0xff]
        %v170 = vld [vmem:[%s115 + $0x108] sm:$0xff]
        %v171 = vld [vmem:[%s115 + $0x110] sm:$0xff]
        %v172 = vld [vmem:[%s115 + $0x118] sm:$0xff]
        %v173 = vld [vmem:[%s115 + $0x120] sm:$0xff]
        %v174 = vld [vmem:[%s115 + $0x128] sm:$0xff]
        %v175 = vld [vmem:[%s115 + $0x130] sm:$0xff]
        %v176 = vld [vmem:[%s115 + $0x138] sm:$0xff]
        %v177 = vld [vmem:[%s115 + $0x140] sm:$0xff]
        %v178 = vld [vmem:[%s115 + $0x148] sm:$0xff]
        %v179 = vld [vmem:[%s115 + $0x150] sm:$0xff]
        %v180 = vld [vmem:[%s115 + $0x158] sm:$0xff]
        %v181 = vld [vmem:[%s115 + $0x160] sm:$0xff]
        %v182 = vld [vmem:[%s115 + $0x168] sm:$0xff]
        %v183 = vld [vmem:[%s115 + $0x170] sm:$0xff]
        %v184 = vld [vmem:[%s115 + $0x178] sm:$0xff]
        %v185 = vld [vmem:[%s115 + $0x180] sm:$0xff]
        %v186 = vld [vmem:[%s115 + $0x188] sm:$0xff]
        %v187 = vld [vmem:[%s115 + $0x190] sm:$0xff]
        %v188 = vld [vmem:[%s115 + $0x198] sm:$0xff]
        %v189 = vld [vmem:[%s115 + $0x1a0] sm:$0xff]
        %v190 = vld [vmem:[%s115 + $0x1a8] sm:$0xff]
        %v191 = vld [vmem:[%s115 + $0x1b0] sm:$0xff]
        %v192 = vld [vmem:[%s115 + $0x1b8] sm:$0xff]
        %v193 = vld [vmem:[%s115 + $0x1c0] sm:$0xff]
        %v194 = vld [vmem:[%s115 + $0x1c8] sm:$0xff]
        %v195 = vld [vmem:[%s115 + $0x1d0] sm:$0xff]
        %v196 = vld [vmem:[%s115 + $0x1d8] sm:$0xff]
        %v197 = vld [vmem:[%s115 + $0x1e0] sm:$0xff]
        %v198 = vld [vmem:[%s115 + $0x1e8] sm:$0xff]
        %v199 = vld [vmem:[%s115 + $0x1f0] sm:$0xff]
        %v200 = vld [vmem:[%s115 + $0x1f8] sm:$0xff]
        %v201 = vld [vmem:[%s115 + $0x200] sm:$0xff]
        %v202 = vld [vmem:[%s115 + $0x208] sm:$0xff]
        %v203 = vld [vmem:[%s115 + $0x210] sm:$0xff]
        %v204 = vld [vmem:[%s115 + $0x218] sm:$0xff]
        %v205 = vld [vmem:[%s115 + $0x220] sm:$0xff]
        %v206 = vld [vmem:[%s115 + $0x228] sm:$0xff]
        %v207 = vld [vmem:[%s115 + $0x230] sm:$0xff]
        %v208 = vld [vmem:[%s115 + $0x238] sm:$0xff]
        %v209 = vld [vmem:[%s115 + $0x240] sm:$0xff]
        %v210 = vld [vmem:[%s115 + $0x248] sm:$0xff]
        %v211 = vld [vmem:[%s115 + $0x250] sm:$0xff]
        %v212 = vld [vmem:[%s115 + $0x258] sm:$0xff]
        %v213 = vld [vmem:[%s115 + $0x260] sm:$0xff]
        %v214 = vld [vmem:[%s115 + $0x268] sm:$0xff]
        %v215 = vld [vmem:[%s115 + $0x270] sm:$0xff]
        %v216 = vld [vmem:[%s115 + $0x278] sm:$0xff]
        %v217 = vld [vmem:[%s115 + $0x280] sm:$0xff]
        %v218 = vld [vmem:[%s115 + $0x288] sm:$0xff]
        %v219 = vld [vmem:[%s115 + $0x290] sm:$0xff]
        %v220 = vld [vmem:[%s115 + $0x298] sm:$0xff]
        %v221 = vld [vmem:[%s115 + $0x2a0] sm:$0xff]
        %v222 = vld [vmem:[%s115 + $0x2a8] sm:$0xff]
        %v223 = vld [vmem:[%s115 + $0x2b0] sm:$0xff]
        %v224 = vld [vmem:[%s115 + $0x2b8] sm:$0xff]
        %v225 = vld [vmem:[%s115 + $0x2c0] sm:$0xff]
        %v226 = vld [vmem:[%s115 + $0x2c8] sm:$0xff]
        %v227 = vld [vmem:[%s115 + $0x2d0] sm:$0xff]
        %v228 = vld [vmem:[%s115 + $0x2d8] sm:$0xff]
        %v229 = vld [vmem:[%s115 + $0x2e0] sm:$0xff]
        %v230 = vld [vmem:[%s115 + $0x2e8] sm:$0xff]
        %v231 = vld [vmem:[%s115 + $0x2f0] sm:$0xff]
        %v232 = vld [vmem:[%s115 + $0x2f8] sm:$0xff]
        %v233 = vld [vmem:[%s115 + $0x300] sm:$0xff]
        %v234 = vld [vmem:[%s115 + $0x308] sm:$0xff]
        %v235 = vld [vmem:[%s115 + $0x310] sm:$0xff]
        %v236 = vld [vmem:[%s115 + $0x318] sm:$0xff]
        %v237 = vld [vmem:[%s115 + $0x320] sm:$0xff]
        %v238 = vld [vmem:[%s115 + $0x328] sm:$0xff]
        %v239 = vld [vmem:[%s115 + $0x330] sm:$0xff]
        %v240 = vld [vmem:[%s115 + $0x338] sm:$0xff]
        %v241 = vld [vmem:[%s115 + $0x340] sm:$0xff]
        %v242 = vld [vmem:[%s115 + $0x348] sm:$0xff]
        %v243 = vld [vmem:[%s115 + $0x350] sm:$0xff]
        %v244 = vld [vmem:[%s115 + $0x358] sm:$0xff]
        %v245 = vld [vmem:[%s115 + $0x360] sm:$0xff]
        %v246 = vld [vmem:[%s115 + $0x368] sm:$0xff]
        %v247 = vld [vmem:[%s115 + $0x370] sm:$0xff]
        %v248 = vld [vmem:[%s115 + $0x378] sm:$0xff]
        %v249 = vld [vmem:[%s115 + $0x380] sm:$0xff]
        %v250 = vld [vmem:[%s115 + $0x388] sm:$0xff]
        %v251 = vld [vmem:[%s115 + $0x390] sm:$0xff]
        %v252 = vld [vmem:[%s115 + $0x398] sm:$0xff]
        %v253 = vld [vmem:[%s115 + $0x3a0] sm:$0xff]
        %v254 = vld [vmem:[%s115 + $0x3a8] sm:$0xff]
        %v255 = vld [vmem:[%s115 + $0x3b0] sm:$0xff]
        %v256 = vld [vmem:[%s115 + $0x3b8] sm:$0xff]
        %v257 = vld [vmem:[%s115 + $0x3c0] sm:$0xff]
        %v258 = vld [vmem:[%s115 + $0x3c8] sm:$0xff]
        %v259 = vld [vmem:[%s115 + $0x3d0] sm:$0xff]
        %v260 = vld [vmem:[%s115 + $0x3d8] sm:$0xff]
        %v261 = vld [vmem:[%s115 + $0x3e0] sm:$0xff]
        %v262 = vld [vmem:[%s115 + $0x3e8] sm:$0xff]
        %v263 = vld [vmem:[%s115 + $0x3f0] sm:$0xff]
        %v264 = vld [vmem:[%s115 + $0x3f8] sm:$0xff]
        %v265 = vsub.f32 0.0, %v137
        %v266 = vsub.f32 0.0, %v138
        %v267 = vsub.f32 0.0, %v139
        %v268 = vsub.f32 0.0, %v140
        %v269 = vsub.f32 0.0, %v141
        %v270 = vsub.f32 0.0, %v142
        %v271 = vsub.f32 0.0, %v143
        %v272 = vsub.f32 0.0, %v144
        %v273 = vsub.f32 0.0, %v145
        %v274 = vsub.f32 0.0, %v146
        %v275 = vsub.f32 0.0, %v147
        %v276 = vsub.f32 0.0, %v148
        %v277 = vsub.f32 0.0, %v149
        %v278 = vsub.f32 0.0, %v150
        %v279 = vsub.f32 0.0, %v151
        %v280 = vsub.f32 0.0, %v152
        %v281 = vsub.f32 0.0, %v153
        %v282 = vsub.f32 0.0, %v154
        %v283 = vsub.f32 0.0, %v155
        %v284 = vsub.f32 0.0, %v156
        %v285 = vsub.f32 0.0, %v157
        %v286 = vsub.f32 0.0, %v158
        %v287 = vsub.f32 0.0, %v159
        %v288 = vsub.f32 0.0, %v160
        %v289 = vsub.f32 0.0, %v161
        %v290 = vsub.f32 0.0, %v162
        %v291 = vsub.f32 0.0, %v163
        %v292 = vsub.f32 0.0, %v164
        %v293 = vsub.f32 0.0, %v165
        %v294 = vsub.f32 0.0, %v166
        %v295 = vsub.f32 0.0, %v167
        %v296 = vsub.f32 0.0, %v168
        %v297 = vsub.f32 0.0, %v169
        %v298 = vsub.f32 0.0, %v170
        %v299 = vsub.f32 0.0, %v171
        %v300 = vsub.f32 0.0, %v172
        %v301 = vsub.f32 0.0, %v173
        %v302 = vsub.f32 0.0, %v174
        %v303 = vsub.f32 0.0, %v175
        %v304 = vsub.f32 0.0, %v176
        %v305 = vsub.f32 0.0, %v177
        %v306 = vsub.f32 0.0, %v178
        %v307 = vsub.f32 0.0, %v179
        %v308 = vsub.f32 0.0, %v180
        %v309 = vsub.f32 0.0, %v181
        %v310 = vsub.f32 0.0, %v182
        %v311 = vsub.f32 0.0, %v183
        %v312 = vsub.f32 0.0, %v184
        %v313 = vsub.f32 0.0, %v185
        %v314 = vsub.f32 0.0, %v186
        %v315 = vsub.f32 0.0, %v187
        %v316 = vsub.f32 0.0, %v188
        %v317 = vsub.f32 0.0, %v189
        %v318 = vsub.f32 0.0, %v190
        %v319 = vsub.f32 0.0, %v191
        %v320 = vsub.f32 0.0, %v192
        %v321 = vsub.f32 0.0, %v193
        %v322 = vsub.f32 0.0, %v194
        %v323 = vsub.f32 0.0, %v195
        %v324 = vsub.f32 0.0, %v196
        %v325 = vsub.f32 0.0, %v197
        %v326 = vsub.f32 0.0, %v198
        %v327 = vsub.f32 0.0, %v199
        %v328 = vsub.f32 0.0, %v200
        %v329 = vsub.f32 0.0, %v201
        %v330 = vsub.f32 0.0, %v202
        %v331 = vsub.f32 0.0, %v203
        %v332 = vsub.f32 0.0, %v204
        %v333 = vsub.f32 0.0, %v205
        %v334 = vsub.f32 0.0, %v206
        %v335 = vsub.f32 0.0, %v207
        %v336 = vsub.f32 0.0, %v208
        %v337 = vsub.f32 0.0, %v209
        %v338 = vsub.f32 0.0, %v210
        %v339 = vsub.f32 0.0, %v211
        %v340 = vsub.f32 0.0, %v212
        %v341 = vsub.f32 0.0, %v213
        %v342 = vsub.f32 0.0, %v214
        %v343 = vsub.f32 0.0, %v215
        %v344 = vsub.f32 0.0, %v216
        %v345 = vsub.f32 0.0, %v217
        %v346 = vsub.f32 0.0, %v218
        %v347 = vsub.f32 0.0, %v219
        %v348 = vsub.f32 0.0, %v220
        %v349 = vsub.f32 0.0, %v221
        %v350 = vsub.f32 0.0, %v222
        %v351 = vsub.f32 0.0, %v223
        %v352 = vsub.f32 0.0, %v224
        %v353 = vsub.f32 0.0, %v225
        %v354 = vsub.f32 0.0, %v226
        %v355 = vsub.f32 0.0, %v227
        %v356 = vsub.f32 0.0, %v228
        %v357 = vsub.f32 0.0, %v229
        %v358 = vsub.f32 0.0, %v230
        %v359 = vsub.f32 0.0, %v231
        %v360 = vsub.f32 0.0, %v232
        %v361 = vsub.f32 0.0, %v233
        %v362 = vsub.f32 0.0, %v234
        %v363 = vsub.f32 0.0, %v235
        %v364 = vsub.f32 0.0, %v236
        %v365 = vsub.f32 0.0, %v237
        %v366 = vsub.f32 0.0, %v238
        %v367 = vsub.f32 0.0, %v239
        %v368 = vsub.f32 0.0, %v240
        %v369 = vsub.f32 0.0, %v241
        %v370 = vsub.f32 0.0, %v242
        %v371 = vsub.f32 0.0, %v243
        %v372 = vsub.f32 0.0, %v244
        %v373 = vsub.f32 0.0, %v245
        %v374 = vsub.f32 0.0, %v246
        %v375 = vsub.f32 0.0, %v247
        %v376 = vsub.f32 0.0, %v248
        %v377 = vsub.f32 0.0, %v249
        %v378 = vsub.f32 0.0, %v250
        %v379 = vsub.f32 0.0, %v251
        %v380 = vsub.f32 0.0, %v252
        %v381 = vsub.f32 0.0, %v253
        %v382 = vsub.f32 0.0, %v254
        %v383 = vsub.f32 0.0, %v255
        %v384 = vsub.f32 0.0, %v256
        %v385 = vsub.f32 0.0, %v257
        %v386 = vsub.f32 0.0, %v258
        %v387 = vsub.f32 0.0, %v259
        %v388 = vsub.f32 0.0, %v260
        %v389 = vsub.f32 0.0, %v261
        %v390 = vsub.f32 0.0, %v262
        %v391 = vsub.f32 0.0, %v263
        %v392 = vsub.f32 0.0, %v264
        %393 = vst [vmem:[%s134] sm:$0xff] %v265
        %394 = vst [vmem:[%s134 + $0x8] sm:$0xff] %v266
        %395 = vst [vmem:[%s134 + $0x10] sm:$0xff] %v267
        %396 = vst [vmem:[%s134 + $0x18] sm:$0xff] %v268
        %397 = vst [vmem:[%s134 + $0x20] sm:$0xff] %v269
        %398 = vst [vmem:[%s134 + $0x28] sm:$0xff] %v270
        %399 = vst [vmem:[%s134 + $0x30] sm:$0xff] %v271
        %400 = vst [vmem:[%s134 + $0x38] sm:$0xff] %v272
        %401 = vst [vmem:[%s134 + $0x40] sm:$0xff] %v273
        %402 = vst [vmem:[%s134 + $0x48] sm:$0xff] %v274
        %403 = vst [vmem:[%s134 + $0x50] sm:$0xff] %v275
        %404 = vst [vmem:[%s134 + $0x58] sm:$0xff] %v276
        %405 = vst [vmem:[%s134 + $0x60] sm:$0xff] %v277
        %406 = vst [vmem:[%s134 + $0x68] sm:$0xff] %v278
        %407 = vst [vmem:[%s134 + $0x70] sm:$0xff] %v279
        %408 = vst [vmem:[%s134 + $0x78] sm:$0xff] %v280
        %409 = vst [vmem:[%s134 + $0x80] sm:$0xff] %v281
        %410 = vst [vmem:[%s134 + $0x88] sm:$0xff] %v282
        %411 = vst [vmem:[%s134 + $0x90] sm:$0xff] %v283
        %412 = vst [vmem:[%s134 + $0x98] sm:$0xff] %v284
        %413 = vst [vmem:[%s134 + $0xa0] sm:$0xff] %v285
        %414 = vst [vmem:[%s134 + $0xa8] sm:$0xff] %v286
        %415 = vst [vmem:[%s134 + $0xb0] sm:$0xff] %v287
        %416 = vst [vmem:[%s134 + $0xb8] sm:$0xff] %v288
        %417 = vst [vmem:[%s134 + $0xc0] sm:$0xff] %v289
        %418 = vst [vmem:[%s134 + $0xc8] sm:$0xff] %v290
        %419 = vst [vmem:[%s134 + $0xd0] sm:$0xff] %v291
        %420 = vst [vmem:[%s134 + $0xd8] sm:$0xff] %v292
        %421 = vst [vmem:[%s134 + $0xe0] sm:$0xff] %v293
        %422 = vst [vmem:[%s134 + $0xe8] sm:$0xff] %v294
        %423 = vst [vmem:[%s134 + $0xf0] sm:$0xff] %v295
        %424 = vst [vmem:[%s134 + $0xf8] sm:$0xff] %v296
        %425 = vst [vmem:[%s134 + $0x100] sm:$0xff] %v297
        %426 = vst [vmem:[%s134 + $0x108] sm:$0xff] %v298
        %427 = vst [vmem:[%s134 + $0x110] sm:$0xff] %v299
        %428 = vst [vmem:[%s134 + $0x118] sm:$0xff] %v300
        %429 = vst [vmem:[%s134 + $0x120] sm:$0xff] %v301
        %430 = vst [vmem:[%s134 + $0x128] sm:$0xff] %v302
        %431 = vst [vmem:[%s134 + $0x130] sm:$0xff] %v303
        %432 = vst [vmem:[%s134 + $0x138] sm:$0xff] %v304
        %433 = vst [vmem:[%s134 + $0x140] sm:$0xff] %v305
        %434 = vst [vmem:[%s134 + $0x148] sm:$0xff] %v306
        %435 = vst [vmem:[%s134 + $0x150] sm:$0xff] %v307
        %436 = vst [vmem:[%s134 + $0x158] sm:$0xff] %v308
        %437 = vst [vmem:[%s134 + $0x160] sm:$0xff] %v309
        %438 = vst [vmem:[%s134 + $0x168] sm:$0xff] %v310
        %439 = vst [vmem:[%s134 + $0x170] sm:$0xff] %v311
        %440 = vst [vmem:[%s134 + $0x178] sm:$0xff] %v312
        %441 = vst [vmem:[%s134 + $0x180] sm:$0xff] %v313
        %442 = vst [vmem:[%s134 + $0x188] sm:$0xff] %v314
        %443 = vst [vmem:[%s134 + $0x190] sm:$0xff] %v315
        %444 = vst [vmem:[%s134 + $0x198] sm:$0xff] %v316
        %445 = vst [vmem:[%s134 + $0x1a0] sm:$0xff] %v317
        %446 = vst [vmem:[%s134 + $0x1a8] sm:$0xff] %v318
        %447 = vst [vmem:[%s134 + $0x1b0] sm:$0xff] %v319
        %448 = vst [vmem:[%s134 + $0x1b8] sm:$0xff] %v320
        %449 = vst [vmem:[%s134 + $0x1c0] sm:$0xff] %v321
        %450 = vst [vmem:[%s134 + $0x1c8] sm:$0xff] %v322
        %451 = vst [vmem:[%s134 + $0x1d0] sm:$0xff] %v323
        %452 = vst [vmem:[%s134 + $0x1d8] sm:$0xff] %v324
        %453 = vst [vmem:[%s134 + $0x1e0] sm:$0xff] %v325
        %454 = vst [vmem:[%s134 + $0x1e8] sm:$0xff] %v326
        %455 = vst [vmem:[%s134 + $0x1f0] sm:$0xff] %v327
        %456 = vst [vmem:[%s134 + $0x1f8] sm:$0xff] %v328
        %457 = vst [vmem:[%s134 + $0x200] sm:$0xff] %v329
        %458 = vst [vmem:[%s134 + $0x208] sm:$0xff] %v330
        %459 = vst [vmem:[%s134 + $0x210] sm:$0xff] %v331
        %460 = vst [vmem:[%s134 + $0x218] sm:$0xff] %v332
        %461 = vst [vmem:[%s134 + $0x220] sm:$0xff] %v333
        %462 = vst [vmem:[%s134 + $0x228] sm:$0xff] %v334
        %463 = vst [vmem:[%s134 + $0x230] sm:$0xff] %v335
        %464 = vst [vmem:[%s134 + $0x238] sm:$0xff] %v336
        %465 = vst [vmem:[%s134 + $0x240] sm:$0xff] %v337
        %466 = vst [vmem:[%s134 + $0x248] sm:$0xff] %v338
        %467 = vst [vmem:[%s134 + $0x250] sm:$0xff] %v339
        %468 = vst [vmem:[%s134 + $0x258] sm:$0xff] %v340
        %469 = vst [vmem:[%s134 + $0x260] sm:$0xff] %v341
        %470 = vst [vmem:[%s134 + $0x268] sm:$0xff] %v342
        %471 = vst [vmem:[%s134 + $0x270] sm:$0xff] %v343
        %472 = vst [vmem:[%s134 + $0x278] sm:$0xff] %v344
        %473 = vst [vmem:[%s134 + $0x280] sm:$0xff] %v345
        %474 = vst [vmem:[%s134 + $0x288] sm:$0xff] %v346
        %475 = vst [vmem:[%s134 + $0x290] sm:$0xff] %v347
        %476 = vst [vmem:[%s134 + $0x298] sm:$0xff] %v348
        %477 = vst [vmem:[%s134 + $0x2a0] sm:$0xff] %v349
        %478 = vst [vmem:[%s134 + $0x2a8] sm:$0xff] %v350
        %479 = vst [vmem:[%s134 + $0x2b0] sm:$0xff] %v351
        %480 = vst [vmem:[%s134 + $0x2b8] sm:$0xff] %v352
        %481 = vst [vmem:[%s134 + $0x2c0] sm:$0xff] %v353
        %482 = vst [vmem:[%s134 + $0x2c8] sm:$0xff] %v354
        %483 = vst [vmem:[%s134 + $0x2d0] sm:$0xff] %v355
        %484 = vst [vmem:[%s134 + $0x2d8] sm:$0xff] %v356
        %485 = vst [vmem:[%s134 + $0x2e0] sm:$0xff] %v357
        %486 = vst [vmem:[%s134 + $0x2e8] sm:$0xff] %v358
        %487 = vst [vmem:[%s134 + $0x2f0] sm:$0xff] %v359
        %488 = vst [vmem:[%s134 + $0x2f8] sm:$0xff] %v360
        %489 = vst [vmem:[%s134 + $0x300] sm:$0xff] %v361
        %490 = vst [vmem:[%s134 + $0x308] sm:$0xff] %v362
        %491 = vst [vmem:[%s134 + $0x310] sm:$0xff] %v363
        %492 = vst [vmem:[%s134 + $0x318] sm:$0xff] %v364
        %493 = vst [vmem:[%s134 + $0x320] sm:$0xff] %v365
        %494 = vst [vmem:[%s134 + $0x328] sm:$0xff] %v366
        %495 = vst [vmem:[%s134 + $0x330] sm:$0xff] %v367
        %496 = vst [vmem:[%s134 + $0x338] sm:$0xff] %v368
        %497 = vst [vmem:[%s134 + $0x340] sm:$0xff] %v369
        %498 = vst [vmem:[%s134 + $0x348] sm:$0xff] %v370
        %499 = vst [vmem:[%s134 + $0x350] sm:$0xff] %v371
        %500 = vst [vmem:[%s134 + $0x358] sm:$0xff] %v372
        %501 = vst [vmem:[%s134 + $0x360] sm:$0xff] %v373
        %502 = vst [vmem:[%s134 + $0x368] sm:$0xff] %v374
        %503 = vst [vmem:[%s134 + $0x370] sm:$0xff] %v375
        %504 = vst [vmem:[%s134 + $0x378] sm:$0xff] %v376
        %505 = vst [vmem:[%s134 + $0x380] sm:$0xff] %v377
        %506 = vst [vmem:[%s134 + $0x388] sm:$0xff] %v378
        %507 = vst [vmem:[%s134 + $0x390] sm:$0xff] %v379
        %508 = vst [vmem:[%s134 + $0x398] sm:$0xff] %v380
        %509 = vst [vmem:[%s134 + $0x3a0] sm:$0xff] %v381
        %510 = vst [vmem:[%s134 + $0x3a8] sm:$0xff] %v382
        %511 = vst [vmem:[%s134 + $0x3b0] sm:$0xff] %v383
        %512 = vst [vmem:[%s134 + $0x3b8] sm:$0xff] %v384
        %513 = vst [vmem:[%s134 + $0x3c0] sm:$0xff] %v385
        %514 = vst [vmem:[%s134 + $0x3c8] sm:$0xff] %v386
        %515 = vst [vmem:[%s134 + $0x3d0] sm:$0xff] %v387
        %516 = vst [vmem:[%s134 + $0x3d8] sm:$0xff] %v388
        %517 = vst [vmem:[%s134 + $0x3e0] sm:$0xff] %v389
        %518 = vst [vmem:[%s134 + $0x3e8] sm:$0xff] %v390
        %519 = vst [vmem:[%s134 + $0x3f0] sm:$0xff] %v391
        %520 = vst [vmem:[%s134 + $0x3f8] sm:$0xff] %v392
        %s521 = sand.u32 %s52, 1
        %s522 = scalar_lea.sflag [#allocation4], %s521
        %s523 = sand.u32 %s52, 1
        %s524 = smul.addr %s523, 1024
        %s525 = scalar_lea.vmem [#allocation5], %s524
        // Predicated region
        $region29: #{tpu_custom_call.1} parent=23 // pred_check
          %p526 = pneg %p62
        $region30: #{tpu_custom_call.1} parent=23 // pred_check_branch
          %528 = sbr.rel (%p526) target = $region32
        $region31: #{tpu_custom_call.1} parent=23 // pred_region
          %s529 = smul.u32 128, %s18
          %531 = vsyncadd %s522, 0
          %s532 = smul.addr %s529, 8
          %s533 = scalar_lea.hbm %s1, %s532
          %s535 = sshll.u32 %s525, 4
          %s536 = int_to_ptr.vmem [resolvable:$true] %s535
          %s537 = sshll.u32 %s533, 4
          %s538 = int_to_ptr.hbm [resolvable:$true] %s537
          %540 = dma.vmem_to_hbm [thread:$0]  %s536, 16384, %s538, %s522
        $region32: #{tpu_custom_call.1} parent=23 // pred_fallthru
          _
      $region24: #{tpu_custom_call.1} parent=5 // pred_fallthru
        _
      %p541 = scmp.le.s32.totalorder 2, %s13
      // Predicated region
      $region33: #{tpu_custom_call.1} parent=5 // pred_check
        %p542 = pneg %p541
      $region34: #{tpu_custom_call.1} parent=5 // pred_check_branch
        %544 = sbr.rel (%p542) target = $region36
      $region35: #{tpu_custom_call.1} parent=5 // pred_region
        %s545 = ssub.s32 %s13, 2
        // Predicated region
        $region37: #{tpu_custom_call.1} parent=35 // pred_check
          %p546 = pneg %p68
        $region38: #{tpu_custom_call.1} parent=35 // pred_check_branch
          %548 = sbr.rel (%p546) target = $region40
        $region39: #{tpu_custom_call.1} parent=35 // pred_region
          %s549 = sand.u32 %s53, 1
          %s550 = scalar_lea.sflag [#allocation4], %s549
          %s551 = sand.u32 %s53, 1
          %s552 = smul.addr %s551, 1024
          %s553 = scalar_lea.vmem [#allocation5], %s552
          %555 = dma.done %s550, 16384
        $region40: #{tpu_custom_call.1} parent=35 // pred_fallthru
          _
      $region36: #{tpu_custom_call.1} parent=5 // pred_fallthru
        _
    $region6: #{tpu_custom_call.1} parent=1 // loop_footer
      %s17 = sadd.s32 1, %s13
    $region7: #{tpu_custom_call.1} parent=1 // loop_footer_branch
      %12 = sbr.rel target = $region3
    $region8: #{tpu_custom_call.1} parent=1 // loop_exit
      _
    %556 = vsyncpa [#allocation3], 1
    %s557 = scalar_lea.sflag [#allocation3], 1
    %558 = vsyncpa %s557, 1
    %559 = vsyncpa [#allocation4], 1
    %s560 = scalar_lea.sflag [#allocation4], 1
    %561 = vsyncpa %s560, 1

</llo_original>
